<compile_context>
chip_gen: v7x
topology: tpu7x:2x2x1
jax: 0.10.0
libtpu: 0.0.40
codegen_flags: <defaults>
</compile_context>

<pallas_src>
import jax
import jax.numpy as jnp
from jax.experimental import pallas as pl
from jax.experimental.pallas import tpu as pltpu


def _dma_copy_kernel(w_hbm, o_hbm, sem):
    # forward() == fc.weight: one contiguous HBM->HBM DMA of the whole weight.
    cp = pltpu.make_async_copy(w_hbm, o_hbm, sem)
    cp.start()
    cp.wait()


def _pallas_weight_passthrough(weight: jax.Array) -> jax.Array:
    nbytes = weight.size * jnp.dtype(weight.dtype).itemsize
    return pl.pallas_call(
        _dma_copy_kernel,
        out_shape=jax.ShapeDtypeStruct(weight.shape, weight.dtype),
        in_specs=[pl.BlockSpec(memory_space=pl.ANY)],     # raw HBM ref, no auto-DMA
        out_specs=pl.BlockSpec(memory_space=pl.ANY),      # raw HBM ref, no auto-DMA
        scratch_shapes=[pltpu.SemaphoreType.DMA(())],
        cost_estimate=pl.CostEstimate(
            flops=0, transcendentals=0, bytes_accessed=2 * nbytes
        ),
    )(weight)


def deterministic_embedding_forward(weight: jax.Array, *, copy: bool = True) -> jax.Array:
    """Pallas equivalent of DeterministicEmbedding.forward().

    weight: (n_objects, init_dim) — the fc.weight parameter.

    copy=False is the exact PyTorch semantics (forward returns the parameter
    itself — buffer identity, zero cost).  copy=True (default) materializes a
    fresh output via a single full-bandwidth HBM->HBM DMA inside a Pallas call.
    """
    if not copy:
        return weight
    return _pallas_weight_passthrough(weight)


def init_deterministic_embedding_weight(key, n_objects: int, init_dim: int) -> jax.Array:
    """Re-implementation of _initialize_weights(): N(0.1, 0.01)."""
    mean, std = 0.1, 0.01
    return mean + std * jax.random.normal(key, (n_objects, init_dim), dtype=jnp.float32)


if __name__ == "__main__":
    key = jax.random.PRNGKey(0)

    # Primary, module-consistent small shapes: 32 objects x 16 latent dims.
    n_objects, init_dim = 32, 16
    weight = init_deterministic_embedding_weight(key, n_objects, init_dim)
    out = jax.block_until_ready(deterministic_embedding_forward(weight))
    assert out.shape == (n_objects, init_dim)
    assert out.dtype == weight.dtype
    assert bool(jnp.array_equal(out, weight))

    # Arbitrary (non-128-multiple) shape: the grid-free DMA handles it directly.
    k1, k2 = jax.random.split(key)
    w2 = init_deterministic_embedding_weight(k1, 24, 5)
    o2 = jax.block_until_ready(deterministic_embedding_forward(w2))
    assert bool(jnp.array_equal(o2, w2))

    # SPoSE-like shape (n_objects=1854, init_dim=100), still a single DMA.
    w3 = init_deterministic_embedding_weight(k2, 1854, 100)
    o3 = jax.block_until_ready(deterministic_embedding_forward(w3))
    assert bool(jnp.array_equal(o3, w3))

    # Zero-copy short-circuit path (exact PyTorch buffer-identity semantics).
    o4 = deterministic_embedding_forward(weight, copy=False)
    assert o4 is weight

    print("KERNEL_OK")
</pallas_src>

<mosaic_0001>
module attributes {stable_mosaic.version = 11 : i64} {
  func.func @_dma_copy_kernel(%arg0: memref<32x16xf32, #tpu.memory_space<any>>, %arg1: memref<32x16xf32, #tpu.memory_space<any>>, %arg2: memref<!tpu.dma_semaphore, #tpu.memory_space<semaphore_mem>>) attributes {dimension_semantics = [], scalar_prefetch = 0 : i64, scratch_operands = 1 : i64, tpu.core_type = #tpu.core_type<tc>} {
    tpu.enqueue_dma source(%arg0 : memref<32x16xf32, #tpu.memory_space<any>>) target(%arg1 : memref<32x16xf32, #tpu.memory_space<any>>) target_semaphore(%arg2 : memref<!tpu.dma_semaphore, #tpu.memory_space<semaphore_mem>>)
    tpu.wait_dma2 semaphore(%arg2 : memref<!tpu.dma_semaphore, #tpu.memory_space<semaphore_mem>>) src(%arg0 : memref<32x16xf32, #tpu.memory_space<any>>) dst(%arg1 : memref<32x16xf32, #tpu.memory_space<any>>)
    return
  }
}

</mosaic_0001>

<llo_original>
// kernel: tpu_custom_call.1
$region0: #{tpu_custom_call.1}
  #allocation0 [shape = 'u32[]', space=smem, size = 0x4, offset = 0x4, fixed_abs, tag = 'smem constant byte address 0x4 - core index']
  #allocation1 [shape = 'u32[144,128]{1,0:T(1,128)}', space=vmem, size = 0x12000, scoped, tag = 'internal scratch']
  #allocation2 [shape = 's32[1]{0}', space=sflag, size = 0x4, scoped, tag = 'scratch operand']
  #allocation3 [shape = 's32[]', space=sflag, size = 0x4, offset = 0, fixed_abs, tag = 'sflag constant byte address 0x0 - dummy sync flag']
  %s0 = inlined_call_operand.vmem [shape: f32[32,16], index: 0, kind: input, shape index: {}]
  %s1 = inlined_call_operand.vmem [shape: f32[32,16], index: 1, kind: output, shape index: {}]
  %s2 = sld [smem:[#allocation0]]
  $region36: #{tpu_custom_call.1} parent=0
    _
  %s4 = ssub.s32 1, %s2
  %s5 = scalar_select 0, %s4, %s2
  %p7 = scmp.lt.u32.totalorder 32, 8
  %p8 = pneg %p7
  // Predicated region
  $region2: #{tpu_custom_call.1} parent=0 // pred_check
    _
  $region3: #{tpu_custom_call.1} parent=0 // pred_check_branch
    %10 = sbr.rel (%p7) target = $region5
  $region4: #{tpu_custom_call.1} parent=0 // pred_region
    %s25 = sand.u32 32, 7
    %p26 = scmp.eq.s32.totalorder %s25, 0
    // Predicated region
    $region17: #{tpu_custom_call.1} parent=4 // pred_check
      %p27 = pneg %p26
    $region18: #{tpu_custom_call.1} parent=4 // pred_check_branch
      %29 = sbr.rel (%p27) target = $region20
    $region19: #{tpu_custom_call.1} parent=4 // pred_region
      loop: start=0, step=1, limit=1
      $region21: #{tpu_custom_call.1} parent=19 // loop_pre_header
        _
      $region22: #{tpu_custom_call.1} parent=19 // loop_header
        %s31 = sphi 0, %s35
        %p32 = scmp.ge.s32.totalorder %s31, 1
        %s36 = sphi %s0, %s0
        %s37 = sphi %s1, %s1
      $region23: #{tpu_custom_call.1} parent=19 // loop_header_branch
        %34 = sbr.rel (%p32) target = $region27
      $region24: #{tpu_custom_call.1} parent=19 // loop_body
        %v38 = vld [vmem:[%s36] sm:$0xff]
        %39 = vst [vmem:[%s37] sm:$0xff] %v38
        %v40 = vld [vmem:[%s36 + $0x8] sm:$0xff]
        %41 = vst [vmem:[%s37 + $0x8] sm:$0xff] %v40
        %v42 = vld [vmem:[%s36 + $0x10] sm:$0xff]
        %43 = vst [vmem:[%s37 + $0x10] sm:$0xff] %v42
        %v44 = vld [vmem:[%s36 + $0x18] sm:$0xff]
        %45 = vst [vmem:[%s37 + $0x18] sm:$0xff] %v44
      $region25: #{tpu_custom_call.1} parent=19 // loop_footer
        %s35 = sadd.s32 1, %s31
      $region26: #{tpu_custom_call.1} parent=19 // loop_footer_branch
        %30 = sbr.rel target = $region22
      $region27: #{tpu_custom_call.1} parent=19 // loop_exit
        _
    $region20: #{tpu_custom_call.1} parent=4 // pred_fallthru
      _
    %p46 = pneg %p26
    // Predicated region
    $region28: #{tpu_custom_call.1} parent=4 // pred_check
      _
    $region29: #{tpu_custom_call.1} parent=4 // pred_check_branch
      %48 = sbr.rel (%p26) target = $region31
    $region30: #{tpu_custom_call.1} parent=4 // pred_region
      %s49 = sand.u32 32, 7
    $region31: #{tpu_custom_call.1} parent=4 // pred_fallthru
      _
  $region5: #{tpu_custom_call.1} parent=0 // pred_fallthru
    _
  // Predicated region
  $region6: #{tpu_custom_call.1} parent=0 // pred_check
    %p11 = pneg %p7
  $region7: #{tpu_custom_call.1} parent=0 // pred_check_branch
    %13 = sbr.rel (%p11) target = $region9
  $region8: #{tpu_custom_call.1} parent=0 // pred_region
    %s14 = sshllo.u32 0, 32
    loop: start=0, step=1, limit=1
    $region10: #{tpu_custom_call.1} parent=8 // loop_pre_header
      _
    $region11: #{tpu_custom_call.1} parent=8 // loop_header
      %s16 = sphi 0, %s20
      %p17 = scmp.ge.s32.totalorder %s16, 1
      %s21 = sphi %s0, %s0
      %s22 = sphi %s1, %s1
    $region12: #{tpu_custom_call.1} parent=8 // loop_header_branch
      %19 = sbr.rel (%p17) target = $region16
    $region13: #{tpu_custom_call.1} parent=8 // loop_body
      %v23 = vld [vmem:[%s21] sm:%s14]
      %24 = vst [vmem:[%s22] sm:%s14] %v23
    $region14: #{tpu_custom_call.1} parent=8 // loop_footer
      %s20 = sadd.s32 1, %s16
    $region15: #{tpu_custom_call.1} parent=8 // loop_footer_branch
      %15 = sbr.rel target = $region11
    $region16: #{tpu_custom_call.1} parent=8 // loop_exit
      _
  $region9: #{tpu_custom_call.1} parent=0 // pred_fallthru
    _
  // Predicated region
  $region32: #{tpu_custom_call.1} parent=0 // pred_check
    _
  $region33: #{tpu_custom_call.1} parent=0 // pred_check_branch
    %52 = sbr.rel (0) target = $region35
  $region34: #{tpu_custom_call.1} parent=0 // pred_region
    %53 = vsyncadd [#allocation2], 512
  $region35: #{tpu_custom_call.1} parent=0 // pred_fallthru
    _
  %s54 = smul.u32 32, 1
  %s55 = sshll.u32 %s54, 4
  %56 = dma.done [#allocation2], %s55
  %57 = vsyncmov [#allocation2]
  %s58 = vpop.sfrf %57
  %p59 = scmp.eq.s32.totalorder %s58, 0
  %p60 = pneg %p59
  %62 = shalt.err (%p60)

</llo_original>
